<compile_context>
chip_gen: v7x
topology: tpu7x:2x2x1
jax: 0.10.0
libtpu: 0.0.40
codegen_flags: <defaults>
</compile_context>

<pallas_src>
import functools

import jax
import jax.numpy as jnp
from jax.experimental import pallas as pl
from jax.experimental.pallas import tpu as pltpu

NEG_SLOPE = 0.01  # nn.LeakyReLU() default negative_slope


def _leaky_relu(x):
    return jnp.where(x >= 0, x, NEG_SLOPE * x)


def mlp_kernel(x_ref, w1_ref, b1_ref, w2_ref, b2_ref, w3_ref, b3_ref, o_ref):
    # x_ref: [5, TB] -- batch on the lane axis, so all intermediates are lane-dense.
    # hidden1: (4,5) @ (5,TB) + b1 -> LeakyReLU
    h = jnp.dot(w1_ref[...], x_ref[...], preferred_element_type=jnp.float32)
    h = _leaky_relu(h + b1_ref[...])
    # hidden2: (10,4) @ (4,TB) + b2 -> LeakyReLU
    h = jnp.dot(w2_ref[...], h, preferred_element_type=jnp.float32)
    h = _leaky_relu(h + b2_ref[...])
    # output: (1,10) @ (10,TB) + b3 -> LeakyReLU, full-vreg (unmasked) [1, TB] store
    h = jnp.dot(w3_ref[...], h, preferred_element_type=jnp.float32)
    o_ref[...] = _leaky_relu(h + b3_ref[...])


@functools.partial(jax.jit, static_argnames=("block_b",))
def mlp_forward(x, params, *, block_b=2048):
    """x: [B, 5] (PyTorch layout). params in PyTorch layout: w [out, in], b [out]."""
    w1, b1, w2, b2, w3, b3 = params
    B = x.shape[0]

    # Batch tile on the lane axis: at least one full 128-lane vreg, at most block_b rows.
    TB = min(block_b, max(128, pl.next_power_of_2(B)))
    Bp = pl.cdiv(B, TB) * TB  # pad so the last tile is full

    # Lane-dense transposed input [5, Bp]; padded tail is zero (results sliced off below).
    xT = jnp.zeros((5, Bp), jnp.float32).at[:, :B].set(x.T.astype(jnp.float32))

    b1c = b1.reshape(4, 1).astype(jnp.float32)
    b2c = b2.reshape(10, 1).astype(jnp.float32)
    b3c = b3.reshape(1, 1).astype(jnp.float32)

    const = lambda i: (0, 0)  # weights/biases: DMA'd once, VMEM-resident across the grid
    out_t = pl.pallas_call(
        mlp_kernel,
        out_shape=jax.ShapeDtypeStruct((1, Bp), jnp.float32),
        grid=(Bp // TB,),
        in_specs=[
            pl.BlockSpec((5, TB), lambda i: (0, i)),  # streamed / double-buffered x tile
            pl.BlockSpec((4, 5), const),
            pl.BlockSpec((4, 1), const),
            pl.BlockSpec((10, 4), const),
            pl.BlockSpec((10, 1), const),
            pl.BlockSpec((1, 10), const),
            pl.BlockSpec((1, 1), const),
        ],
        out_specs=pl.BlockSpec((1, TB), lambda i: (0, i)),  # lane-dense output store
        compiler_params=pltpu.CompilerParams(
            dimension_semantics=("parallel",),       # 2 TC sharding on v7x
            vmem_limit_bytes=32 * 1024 * 1024,       # explicit budget, safe on v5e/v6e/v7x
        ),
    )(xT, w1.astype(jnp.float32), b1c, w2.astype(jnp.float32), b2c,
      w3.astype(jnp.float32), b3c)

    # [1, Bp] -> slice off padding -> [B, 1] (cheap reshape outside the kernel).
    return out_t[0, :B].reshape(B, 1)


def init_params(key):
    """Deterministic init mirroring PyTorch nn.Linear default U[-1/sqrt(fan_in), +...],
    stored in PyTorch layout: w [out_features, in_features], b [out_features]."""
    def linear(key, fan_in, fan_out):
        kw, kb = jax.random.split(key)
        bound = 1.0 / float(fan_in) ** 0.5
        w = jax.random.uniform(kw, (fan_out, fan_in), jnp.float32, -bound, bound)
        b = jax.random.uniform(kb, (fan_out,), jnp.float32, -bound, bound)
        return w, b

    k1, k2, k3 = jax.random.split(key, 3)
    w1, b1 = linear(k1, 5, 4)
    w2, b2 = linear(k2, 4, 10)
    w3, b3 = linear(k3, 10, 1)
    return (w1, b1, w2, b2, w3, b3)


def mlp_reference(x, params):
    """Pure-JAX reference of the PyTorch forward pass."""
    w1, b1, w2, b2, w3, b3 = params
    h = _leaky_relu(x @ w1.T + b1)
    h = _leaky_relu(h @ w2.T + b2)
    return _leaky_relu(h @ w3.T + b3)


if __name__ == "__main__":
    key = jax.random.PRNGKey(0)
    kx, kp = jax.random.split(key)
    params = init_params(kp)

    # Small-shape check (single tile, B padded to 128 lanes).
    B = 8
    x = jax.random.normal(kx, (B, 5), dtype=jnp.float32)
    out = jax.block_until_ready(mlp_forward(x, params))
    ref = mlp_reference(x, params)
    assert out.shape == (B, 1), out.shape
    assert jnp.allclose(out, ref, atol=1e-5, rtol=1e-5), (out, ref)

    # Multi-tile check: exercises the batch grid, pipelining, and ragged-tail padding.
    B2 = 300
    x2 = jax.random.normal(jax.random.PRNGKey(1), (B2, 5), dtype=jnp.float32)
    out2 = jax.block_until_ready(mlp_forward(x2, params, block_b=128))
    ref2 = mlp_reference(x2, params)
    assert out2.shape == (B2, 1), out2.shape
    assert jnp.allclose(out2, ref2, atol=1e-5, rtol=1e-5), (out2, ref2)

    print("KERNEL_OK")
</pallas_src>

<mosaic_0001>
module attributes {stable_mosaic.version = 11 : i64} {
  func.func @mlp_kernel(%arg0: i32, %arg1: memref<5x128xf32, #tpu.memory_space<vmem>>, %arg2: memref<4x5xf32, #tpu.memory_space<vmem>>, %arg3: memref<4x1xf32, #tpu.memory_space<vmem>>, %arg4: memref<10x4xf32, #tpu.memory_space<vmem>>, %arg5: memref<10x1xf32, #tpu.memory_space<vmem>>, %arg6: memref<1x10xf32, #tpu.memory_space<vmem>>, %arg7: memref<1x1xf32, #tpu.memory_space<vmem>>, %arg8: memref<1x128xf32, #tpu.memory_space<vmem>>) attributes {dimension_semantics = [#tpu.dimension_semantics<parallel>], iteration_bounds = array<i64: 1>, scalar_prefetch = 0 : i64, scratch_operands = 0 : i64, tpu.core_type = #tpu.core_type<tc>, window_params = [{transform_indices = @transform_0, window_bounds = array<i64: 5, 128>}, {pipeline_mode = #tpu.pipeline_mode<synchronous>, transform_indices = @transform_1, window_bounds = array<i64: 4, 5>}, {pipeline_mode = #tpu.pipeline_mode<synchronous>, transform_indices = @transform_2, window_bounds = array<i64: 4, 1>}, {pipeline_mode = #tpu.pipeline_mode<synchronous>, transform_indices = @transform_3, window_bounds = array<i64: 10, 4>}, {pipeline_mode = #tpu.pipeline_mode<synchronous>, transform_indices = @transform_4, window_bounds = array<i64: 10, 1>}, {pipeline_mode = #tpu.pipeline_mode<synchronous>, transform_indices = @transform_5, window_bounds = array<i64: 1, 10>}, {pipeline_mode = #tpu.pipeline_mode<synchronous>, transform_indices = @transform_6, window_bounds = array<i64: 1, 1>}, {transform_indices = @transform_7, window_bounds = array<i64: 1, 128>}]} {
    %c0 = arith.constant 0 : index
    %c0_0 = arith.constant 0 : index
    %0 = vector.load %arg2[%c0, %c0_0] : memref<4x5xf32, #tpu.memory_space<vmem>>, vector<4x5xf32>
    %c0_1 = arith.constant 0 : index
    %c0_2 = arith.constant 0 : index
    %1 = vector.load %arg1[%c0_1, %c0_2] : memref<5x128xf32, #tpu.memory_space<vmem>>, vector<5x128xf32>
    %cst = arith.constant dense<0.000000e+00> : vector<4x128xf32>
    %2 = tpu.matmul %0, %1, %cst {dimension_numbers = #tpu.dot_dimension_numbers<[1], [0], [0], [1], [0, 0, 1, 1], [], []>} : vector<4x5xf32>, vector<5x128xf32>, vector<4x128xf32> -> vector<4x128xf32>
    %c0_3 = arith.constant 0 : index
    %c0_4 = arith.constant 0 : index
    %3 = vector.load %arg3[%c0_3, %c0_4] : memref<4x1xf32, #tpu.memory_space<vmem>>, vector<4x1xf32>
    %4 = vector.broadcast %3 : vector<4x1xf32> to vector<4x128xf32>
    %5 = arith.addf %2, %4 : vector<4x128xf32>
    %cst_5 = arith.constant 0.000000e+00 : f32
    %6 = vector.broadcast %cst_5 : f32 to vector<4x128xf32>
    %7 = arith.cmpf oge, %5, %6 : vector<4x128xf32>
    %cst_6 = arith.constant 0.00999999977 : f32
    %8 = vector.broadcast %cst_6 : f32 to vector<4x128xf32>
    %9 = arith.mulf %8, %5 : vector<4x128xf32>
    %10 = arith.select %7, %5, %9 : vector<4x128xi1>, vector<4x128xf32>
    %c0_7 = arith.constant 0 : index
    %c0_8 = arith.constant 0 : index
    %11 = vector.load %arg4[%c0_7, %c0_8] : memref<10x4xf32, #tpu.memory_space<vmem>>, vector<10x4xf32>
    %cst_9 = arith.constant dense<0.000000e+00> : vector<10x128xf32>
    %12 = tpu.matmul %11, %10, %cst_9 {dimension_numbers = #tpu.dot_dimension_numbers<[1], [0], [0], [1], [0, 0, 1, 1], [], []>} : vector<10x4xf32>, vector<4x128xf32>, vector<10x128xf32> -> vector<10x128xf32>
    %c0_10 = arith.constant 0 : index
    %c0_11 = arith.constant 0 : index
    %13 = vector.load %arg5[%c0_10, %c0_11] : memref<10x1xf32, #tpu.memory_space<vmem>>, vector<10x1xf32>
    %14 = vector.broadcast %13 : vector<10x1xf32> to vector<10x128xf32>
    %15 = arith.addf %12, %14 : vector<10x128xf32>
    %cst_12 = arith.constant 0.000000e+00 : f32
    %16 = vector.broadcast %cst_12 : f32 to vector<10x128xf32>
    %17 = arith.cmpf oge, %15, %16 : vector<10x128xf32>
    %cst_13 = arith.constant 0.00999999977 : f32
    %18 = vector.broadcast %cst_13 : f32 to vector<10x128xf32>
    %19 = arith.mulf %18, %15 : vector<10x128xf32>
    %20 = arith.select %17, %15, %19 : vector<10x128xi1>, vector<10x128xf32>
    %c0_14 = arith.constant 0 : index
    %c0_15 = arith.constant 0 : index
    %21 = vector.load %arg6[%c0_14, %c0_15] : memref<1x10xf32, #tpu.memory_space<vmem>>, vector<1x10xf32>
    %cst_16 = arith.constant dense<0.000000e+00> : vector<1x128xf32>
    %22 = tpu.matmul %21, %20, %cst_16 {dimension_numbers = #tpu.dot_dimension_numbers<[1], [0], [0], [1], [0, 0, 1, 1], [], []>} : vector<1x10xf32>, vector<10x128xf32>, vector<1x128xf32> -> vector<1x128xf32>
    %c0_17 = arith.constant 0 : index
    %c0_18 = arith.constant 0 : index
    %23 = vector.load %arg7[%c0_17, %c0_18] : memref<1x1xf32, #tpu.memory_space<vmem>>, vector<1x1xf32>
    %24 = vector.broadcast %23 : vector<1x1xf32> to vector<1x128xf32>
    %25 = arith.addf %22, %24 : vector<1x128xf32>
    %cst_19 = arith.constant 0.000000e+00 : f32
    %26 = vector.broadcast %cst_19 : f32 to vector<1x128xf32>
    %27 = arith.cmpf oge, %25, %26 : vector<1x128xf32>
    %cst_20 = arith.constant 0.00999999977 : f32
    %28 = vector.broadcast %cst_20 : f32 to vector<1x128xf32>
    %29 = arith.mulf %28, %25 : vector<1x128xf32>
    %30 = arith.select %27, %25, %29 : vector<1x128xi1>, vector<1x128xf32>
    %c0_21 = arith.constant 0 : index
    %c0_22 = arith.constant 0 : index
    %31 = vector.load %arg8[%c0_21, %c0_22] : memref<1x128xf32, #tpu.memory_space<vmem>>, vector<1x128xf32>
    tpu.vector_store %arg8[%c0_21, %c0_22], %30 {strides = array<i32>} : memref<1x128xf32, #tpu.memory_space<vmem>>, vector<1x128xf32>,
    return
  }
  func.func @transform_0(%arg0: i32) -> (i32, i32) {
    %c0_i32 = arith.constant 0 : i32
    %c0_i32_0 = arith.constant 0 : i32
    return %c0_i32, %arg0 : i32, i32
  }
  func.func @transform_1(%arg0: i32) -> (i32, i32) {
    %c0_i32 = arith.constant 0 : i32
    %c0_i32_0 = arith.constant 0 : i32
    %c0_i32_1 = arith.constant 0 : i32
    return %c0_i32, %c0_i32_0 : i32, i32
  }
  func.func @transform_2(%arg0: i32) -> (i32, i32) {
    %c0_i32 = arith.constant 0 : i32
    %c0_i32_0 = arith.constant 0 : i32
    %c0_i32_1 = arith.constant 0 : i32
    return %c0_i32, %c0_i32_0 : i32, i32
  }
  func.func @transform_3(%arg0: i32) -> (i32, i32) {
    %c0_i32 = arith.constant 0 : i32
    %c0_i32_0 = arith.constant 0 : i32
    %c0_i32_1 = arith.constant 0 : i32
    return %c0_i32, %c0_i32_0 : i32, i32
  }
  func.func @transform_4(%arg0: i32) -> (i32, i32) {
    %c0_i32 = arith.constant 0 : i32
    %c0_i32_0 = arith.constant 0 : i32
    %c0_i32_1 = arith.constant 0 : i32
    return %c0_i32, %c0_i32_0 : i32, i32
  }
  func.func @transform_5(%arg0: i32) -> (i32, i32) {
    %c0_i32 = arith.constant 0 : i32
    %c0_i32_0 = arith.constant 0 : i32
    %c0_i32_1 = arith.constant 0 : i32
    return %c0_i32, %c0_i32_0 : i32, i32
  }
  func.func @transform_6(%arg0: i32) -> (i32, i32) {
    %c0_i32 = arith.constant 0 : i32
    %c0_i32_0 = arith.constant 0 : i32
    %c0_i32_1 = arith.constant 0 : i32
    return %c0_i32, %c0_i32_0 : i32, i32
  }
  func.func @transform_7(%arg0: i32) -> (i32, i32) {
    %c0_i32 = arith.constant 0 : i32
    %c0_i32_0 = arith.constant 0 : i32
    return %c0_i32, %arg0 : i32, i32
  }
}

</mosaic_0001>

<llo_original>
// kernel: mlp_forward.1
$region0: #{mlp_forward.1}
  #allocation0 [shape = 'u32[]', space=smem, size = 0x4, offset = 0x4, fixed_abs, tag = 'smem constant byte address 0x4 - core index']
  #allocation1 [shape = 'u32[144,128]{1,0:T(1,128)}', space=vmem, size = 0x12000, scoped, tag = 'internal scratch']
  #allocation2 [shape = 'f32[1,1]{1,0:T(1,128)S(1)}', space=vmem, size = 0x200, scoped, tag = 'scoped memory for mlp_forward.1']
  %s0 = inlined_call_operand.vmem [shape: f32[5,128], index: 0, kind: input, shape index: {}]
  %s1 = inlined_call_operand.vmem [shape: f32[4,5], index: 1, kind: input, shape index: {}]
  %s2 = inlined_call_operand.vmem [shape: f32[4,1], index: 2, kind: input, shape index: {}]
  %s3 = inlined_call_operand.vmem [shape: f32[10,4], index: 3, kind: input, shape index: {}]
  %s4 = inlined_call_operand.vmem [shape: f32[10,1], index: 4, kind: input, shape index: {}]
  %s5 = inlined_call_operand.vmem [shape: f32[1,10], index: 5, kind: input, shape index: {}]
  %s6 = inlined_call_operand.<no memory space> [shape: f32[1,1], index: 6, kind: input, shape index: {}]
  %s7 = inlined_call_operand.vmem [shape: f32[1,128], index: 7, kind: output, shape index: {}]
  %s8 = sld [smem:[#allocation0]]
  $region38: #{mlp_forward.1} parent=0
    _
  %s10 = ssub.s32 1, %s8
  %s11 = scalar_select 0, %s10, %s8
  %v12 = vstv %s6
  %13 = vst [vmem:[#allocation2] sm:$0x1] %v12
  // Predicated region
  $region2: #{mlp_forward.1} parent=0 // pred_check
    _
  $region3: #{mlp_forward.1} parent=0 // pred_check_branch
    %15 = sbr.rel (0) target = $region5
  $region4: #{mlp_forward.1} parent=0 // pred_region
    _
  $region5: #{mlp_forward.1} parent=0 // pred_fallthru
    _
  // Predicated region
  $region6: #{mlp_forward.1} parent=0 // pred_check
    _
  $region7: #{mlp_forward.1} parent=0 // pred_check_branch
    %17 = sbr.rel (0) target = $region9
  $region8: #{mlp_forward.1} parent=0 // pred_region
    _
  $region9: #{mlp_forward.1} parent=0 // pred_fallthru
    _
  // Predicated region
  $region10: #{mlp_forward.1} parent=0 // pred_check
    _
  $region11: #{mlp_forward.1} parent=0 // pred_check_branch
    %19 = sbr.rel (0) target = $region13
  $region12: #{mlp_forward.1} parent=0 // pred_region
    _
  $region13: #{mlp_forward.1} parent=0 // pred_fallthru
    _
  // Predicated region
  $region14: #{mlp_forward.1} parent=0 // pred_check
    _
  $region15: #{mlp_forward.1} parent=0 // pred_check_branch
    %21 = sbr.rel (0) target = $region17
  $region16: #{mlp_forward.1} parent=0 // pred_region
    _
  $region17: #{mlp_forward.1} parent=0 // pred_fallthru
    _
  // Predicated region
  $region18: #{mlp_forward.1} parent=0 // pred_check
    _
  $region19: #{mlp_forward.1} parent=0 // pred_check_branch
    %23 = sbr.rel (0) target = $region21
  $region20: #{mlp_forward.1} parent=0 // pred_region
    _
  $region21: #{mlp_forward.1} parent=0 // pred_fallthru
    _
  // Predicated region
  $region22: #{mlp_forward.1} parent=0 // pred_check
    _
  $region23: #{mlp_forward.1} parent=0 // pred_check_branch
    %25 = sbr.rel (0) target = $region25
  $region24: #{mlp_forward.1} parent=0 // pred_region
    _
  $region25: #{mlp_forward.1} parent=0 // pred_fallthru
    _
  // Predicated region
  $region26: #{mlp_forward.1} parent=0 // pred_check
    _
  $region27: #{mlp_forward.1} parent=0 // pred_check_branch
    %27 = sbr.rel (0) target = $region29
  $region28: #{mlp_forward.1} parent=0 // pred_region
    _
  $region29: #{mlp_forward.1} parent=0 // pred_fallthru
    _
  %v28 = vld [vmem:[%s1] sm:$0xf]
  %v29 = vld [vmem:[%s0] sm:$0x1f]
  %v30 = vld [vmem:[%s2] sm:$0xf]
  %32 = vset.pattern.permute.xlu0 0
  %33 = vperm.xlu0 %32, %v30
  %v34 = vpop.permute.xlu0 %33
  %vm36 = vcmask 39936
  %v38 = vsel %vm36, %v28, 0
  %vm40 = vcmask 1044480
  %v42 = vsel %vm40, %v29, 0
  %44 = vmatprep.subr.mxu0 0.0
  %45 = vmatpush1.msra.mxu0 %v42
  %46 = vmatprep.subr.mxu0 0.0
  %47 = vmatpush1.msra.mxu0 0.0
  %48 = vmatprep.subr.mxu0 0.0
  %49 = vmatpush1.msra.mxu0 0.0
  %50 = vmatprep.subr.mxu0 0.0
  %51 = vmatpush1.msra.mxu0 0.0
  %52 = vmatprep.subr.mxu0 0.0
  %53 = vmatpush1.msra.mxu0 0.0
  %54 = vmatprep.subr.mxu0 0.0
  %55 = vmatpush1.msra.mxu0 0.0
  %56 = vmatprep.subr.mxu0 0.0
  %57 = vmatpush1.msra.mxu0 0.0
  %58 = vmatprep.subr.mxu0 0.0
  %59 = vmatpush1.msra.mxu0 0.0
  %60 = vmatprep.subr.mxu0 0.0
  %61 = vmatpush1.msra.mxu0 0.0
  %62 = vmatprep.subr.mxu0 0.0
  %63 = vmatpush1.msra.mxu0 0.0
  %64 = vmatprep.subr.mxu0 0.0
  %65 = vmatpush1.msra.mxu0 0.0
  %66 = vmatprep.subr.mxu0 0.0
  %67 = vmatpush1.msra.mxu0 0.0
  %68 = vmatprep.subr.mxu0 0.0
  %69 = vmatpush1.msra.mxu0 0.0
  %70 = vmatprep.subr.mxu0 0.0
  %71 = vmatpush1.msra.mxu0 0.0
  %72 = vmatprep.subr.mxu0 0.0
  %73 = vmatpush1.msra.mxu0 0.0
  %74 = vmatprep.subr.mxu0 0.0
  %75 = vmatpush1.msra.mxu0 0.0
  %76 = vmatprep.subr.mxu0 0.0
  %77 = vmatpush1.msra.mxu0 0.0
  %78 = vmatprep.subr.mxu0 0.0
  %79 = vmatpush1.msra.mxu0 0.0
  %80 = vmatprep.subr.mxu0 0.0
  %81 = vmatpush1.msra.mxu0 0.0
  %82 = vmatprep.subr.mxu0 0.0
  %83 = vmatpush1.msra.mxu0 0.0
  %84 = vmatprep.subr.mxu0 0.0
  %85 = vmatpush1.msra.mxu0 0.0
  %86 = vmatprep.subr.mxu0 0.0
  %87 = vmatpush1.msra.mxu0 0.0
  %88 = vmatprep.subr.mxu0 0.0
  %89 = vmatpush1.msra.mxu0 0.0
  %90 = vmatprep.subr.mxu0 0.0
  %91 = vmatpush1.msra.mxu0 0.0
  %92 = vmatprep.subr.mxu0 0.0
  %93 = vmatpush1.msra.mxu0 0.0
  %94 = vmatprep.subr.mxu0 0.0
  %95 = vmatpush1.msra.mxu0 0.0
  %96 = vmatprep.subr.mxu0 0.0
  %97 = vmatpush1.msra.mxu0 0.0
  %98 = vmatprep.subr.mxu0 0.0
  %99 = vmatpush1.msra.mxu0 0.0
  %100 = vmatprep.subr.mxu0 0.0
  %101 = vmatpush1.msra.mxu0 0.0
  %102 = vmatprep.subr.mxu0 0.0
  %103 = vmatpush1.msra.mxu0 0.0
  %104 = vmatprep.subr.mxu0 0.0
  %105 = vmatpush1.msra.mxu0 0.0
  %106 = vmatprep.subr.mxu0 0.0
  %107 = vmatpush1.msra.mxu0 0.0
  %108 = vmatprep.mubr.f32.mxu0 0.0
  %109 = vmatmul.mubr.f32.gmra.mrb[0].mxu0 %v38
  %v110 = vpop.f32.mrb[0].mxu0
  %v111 = vadd.f32 %v34, %v110
  %v112 = vpop.f32.mrb[0].mxu0
  %113 = vdwg.mxu0
  %vm114 = vcmp.ge.f32.partialorder %v111, 0.0
  %v115 = vmul.f32 %v111, 0.01
  %v116 = vsel %vm114, %v111, %v115
  %v117 = vld [vmem:[%s3] sm:$0xff]
  %v118 = vld [vmem:[%s3 + $0x8] sm:$0x3]
  %v119 = vld [vmem:[%s4] sm:$0xff]
  %v120 = vld [vmem:[%s4 + $0x8] sm:$0x3]
  %122 = vset.pattern.permute.xlu0 0
  %123 = vperm.xlu0 %122, %v119
  %v124 = vpop.permute.xlu0 %123
  %127 = vset.pattern.permute.xlu0 0
  %128 = vperm.xlu0 %127, %v120
  %v129 = vpop.permute.xlu0 %128
  %vm131 = vcmask 31744
  %v133 = vsel %vm131, %v117, 0
  %v136 = vsel %vm131, %v118, 0
  %vm138 = vcmask 1043456
  %v140 = vsel %vm138, %v116, 0
  %142 = vmatprep.subr.mxu0 0.0
  %143 = vmatpush1.msra.mxu0 %v140
  %144 = vmatprep.subr.mxu0 0.0
  %145 = vmatpush1.msra.mxu0 0.0
  %146 = vmatprep.subr.mxu0 0.0
  %147 = vmatpush1.msra.mxu0 0.0
  %148 = vmatprep.subr.mxu0 0.0
  %149 = vmatpush1.msra.mxu0 0.0
  %150 = vmatprep.subr.mxu0 0.0
  %151 = vmatpush1.msra.mxu0 0.0
  %152 = vmatprep.subr.mxu0 0.0
  %153 = vmatpush1.msra.mxu0 0.0
  %154 = vmatprep.subr.mxu0 0.0
  %155 = vmatpush1.msra.mxu0 0.0
  %156 = vmatprep.subr.mxu0 0.0
  %157 = vmatpush1.msra.mxu0 0.0
  %158 = vmatprep.subr.mxu0 0.0
  %159 = vmatpush1.msra.mxu0 0.0
  %160 = vmatprep.subr.mxu0 0.0
  %161 = vmatpush1.msra.mxu0 0.0
  %162 = vmatprep.subr.mxu0 0.0
  %163 = vmatpush1.msra.mxu0 0.0
  %164 = vmatprep.subr.mxu0 0.0
  %165 = vmatpush1.msra.mxu0 0.0
  %166 = vmatprep.subr.mxu0 0.0
  %167 = vmatpush1.msra.mxu0 0.0
  %168 = vmatprep.subr.mxu0 0.0
  %169 = vmatpush1.msra.mxu0 0.0
  %170 = vmatprep.subr.mxu0 0.0
  %171 = vmatpush1.msra.mxu0 0.0
  %172 = vmatprep.subr.mxu0 0.0
  %173 = vmatpush1.msra.mxu0 0.0
  %174 = vmatprep.subr.mxu0 0.0
  %175 = vmatpush1.msra.mxu0 0.0
  %176 = vmatprep.subr.mxu0 0.0
  %177 = vmatpush1.msra.mxu0 0.0
  %178 = vmatprep.subr.mxu0 0.0
  %179 = vmatpush1.msra.mxu0 0.0
  %180 = vmatprep.subr.mxu0 0.0
  %181 = vmatpush1.msra.mxu0 0.0
  %182 = vmatprep.subr.mxu0 0.0
  %183 = vmatpush1.msra.mxu0 0.0
  %184 = vmatprep.subr.mxu0 0.0
  %185 = vmatpush1.msra.mxu0 0.0
  %186 = vmatprep.subr.mxu0 0.0
  %187 = vmatpush1.msra.mxu0 0.0
  %188 = vmatprep.subr.mxu0 0.0
  %189 = vmatpush1.msra.mxu0 0.0
  %190 = vmatprep.subr.mxu0 0.0
  %191 = vmatpush1.msra.mxu0 0.0
  %192 = vmatprep.subr.mxu0 0.0
  %193 = vmatpush1.msra.mxu0 0.0
  %194 = vmatprep.subr.mxu0 0.0
  %195 = vmatpush1.msra.mxu0 0.0
  %196 = vmatprep.subr.mxu0 0.0
  %197 = vmatpush1.msra.mxu0 0.0
  %198 = vmatprep.subr.mxu0 0.0
  %199 = vmatpush1.msra.mxu0 0.0
  %200 = vmatprep.subr.mxu0 0.0
  %201 = vmatpush1.msra.mxu0 0.0
  %202 = vmatprep.subr.mxu0 0.0
  %203 = vmatpush1.msra.mxu0 0.0
  %204 = vmatprep.subr.mxu0 0.0
  %205 = vmatpush1.msra.mxu0 0.0
  %206 = vmatprep.mubr.f32.mxu0 0.0
  %207 = vmatmul.mubr.f32.gmra.mrb[0].mxu0 %v133
  %v208 = vpop.f32.mrb[0].mxu0
  %v209 = vadd.f32 %v124, %v208
  %v210 = vpop.f32.mrb[0].mxu0
  %211 = vmatprep.mubr.f32.mxu0 0.0
  %212 = vmatmul.mubr.f32.gmra.mrb[0].mxu0 %v136
  %v213 = vpop.f32.mrb[0].mxu0
  %v214 = vadd.f32 %v129, %v213
  %v215 = vpop.f32.mrb[0].mxu0
  %216 = vdwg.mxu0
  %vm217 = vcmp.ge.f32.partialorder %v209, 0.0
  %vm218 = vcmp.ge.f32.partialorder %v214, 0.0
  %v219 = vmul.f32 %v209, 0.01
  %v220 = vmul.f32 %v214, 0.01
  %v221 = vsel %vm217, %v209, %v219
  %v222 = vsel %vm218, %v214, %v220
  %v223 = vld [vmem:[%s5] sm:$0x1]
  %v224 = vld [vmem:[#allocation2] sm:$0x1]
  %226 = vset.pattern.permute.xlu0 0
  %227 = vperm.xlu0 %226, %v224
  %v228 = vpop.permute.xlu0 %227
  %v230 = vlaneseq
  %v231 = vshrl.u32 %v230, 7
  %v232 = vsub.s32 0, %v231
  %v233 = vrot.slane %v228, %v232
  %vm234 = vcmask 80896
  %v236 = vsel %vm234, %v223, 0
  %vm238 = vcmask 1041408
  %v240 = vsel %vm238, %v222, 0
  %242 = vmatprep.subr.mxu0 0.0
  %243 = vmatpush1.msra.mxu0 %v221
  %244 = vmatprep.subr.mxu0 0.0
  %245 = vmatpush1.msra.mxu0 %v240
  %246 = vmatprep.subr.mxu0 0.0
  %247 = vmatpush1.msra.mxu0 0.0
  %248 = vmatprep.subr.mxu0 0.0
  %249 = vmatpush1.msra.mxu0 0.0
  %250 = vmatprep.subr.mxu0 0.0
  %251 = vmatpush1.msra.mxu0 0.0
  %252 = vmatprep.subr.mxu0 0.0
  %253 = vmatpush1.msra.mxu0 0.0
  %254 = vmatprep.subr.mxu0 0.0
  %255 = vmatpush1.msra.mxu0 0.0
  %256 = vmatprep.subr.mxu0 0.0
  %257 = vmatpush1.msra.mxu0 0.0
  %258 = vmatprep.subr.mxu0 0.0
  %259 = vmatpush1.msra.mxu0 0.0
  %260 = vmatprep.subr.mxu0 0.0
  %261 = vmatpush1.msra.mxu0 0.0
  %262 = vmatprep.subr.mxu0 0.0
  %263 = vmatpush1.msra.mxu0 0.0
  %264 = vmatprep.subr.mxu0 0.0
  %265 = vmatpush1.msra.mxu0 0.0
  %266 = vmatprep.subr.mxu0 0.0
  %267 = vmatpush1.msra.mxu0 0.0
  %268 = vmatprep.subr.mxu0 0.0
  %269 = vmatpush1.msra.mxu0 0.0
  %270 = vmatprep.subr.mxu0 0.0
  %271 = vmatpush1.msra.mxu0 0.0
  %272 = vmatprep.subr.mxu0 0.0
  %273 = vmatpush1.msra.mxu0 0.0
  %274 = vmatprep.subr.mxu0 0.0
  %275 = vmatpush1.msra.mxu0 0.0
  %276 = vmatprep.subr.mxu0 0.0
  %277 = vmatpush1.msra.mxu0 0.0
  %278 = vmatprep.subr.mxu0 0.0
  %279 = vmatpush1.msra.mxu0 0.0
  %280 = vmatprep.subr.mxu0 0.0
  %281 = vmatpush1.msra.mxu0 0.0
  %282 = vmatprep.subr.mxu0 0.0
  %283 = vmatpush1.msra.mxu0 0.0
  %284 = vmatprep.subr.mxu0 0.0
  %285 = vmatpush1.msra.mxu0 0.0
  %286 = vmatprep.subr.mxu0 0.0
  %287 = vmatpush1.msra.mxu0 0.0
  %288 = vmatprep.subr.mxu0 0.0
  %289 = vmatpush1.msra.mxu0 0.0
  %290 = vmatprep.subr.mxu0 0.0
  %291 = vmatpush1.msra.mxu0 0.0
  %292 = vmatprep.subr.mxu0 0.0
  %293 = vmatpush1.msra.mxu0 0.0
  %294 = vmatprep.subr.mxu0 0.0
  %295 = vmatpush1.msra.mxu0 0.0
  %296 = vmatprep.subr.mxu0 0.0
  %297 = vmatpush1.msra.mxu0 0.0
  %298 = vmatprep.subr.mxu0 0.0
  %299 = vmatpush1.msra.mxu0 0.0
  %300 = vmatprep.subr.mxu0 0.0
  %301 = vmatpush1.msra.mxu0 0.0
  %302 = vmatprep.subr.mxu0 0.0
  %303 = vmatpush1.msra.mxu0 0.0
  %304 = vmatprep.subr.mxu0 0.0
  %305 = vmatpush1.msra.mxu0 0.0
  %306 = vmatprep.mubr.f32.mxu0 0.0
  %307 = vmatmul.mubr.f32.gmra.mrb[0].mxu0 %v236
  %v308 = vpop.f32.mrb[0].mxu0
  %v309 = vadd.f32 %v233, %v308
  %v310 = vpop.f32.mrb[0].mxu0
  %311 = vdwg.mxu0
  %vm312 = vcmp.ge.f32.partialorder %v309, 0.0
  %v313 = vmul.f32 %v309, 0.01
  %v314 = vsel %vm312, %v309, %v313
  %315 = vst [vmem:[%s7] sm:$0x1] %v314
  // Predicated region
  $region30: #{mlp_forward.1} parent=0 // pred_check
    _
  $region31: #{mlp_forward.1} parent=0 // pred_check_branch
    %317 = sbr.rel (0) target = $region33
  $region32: #{mlp_forward.1} parent=0 // pred_region
    _
  $region33: #{mlp_forward.1} parent=0 // pred_fallthru
    _
  // Predicated region
  $region34: #{mlp_forward.1} parent=0 // pred_check
    _
  $region35: #{mlp_forward.1} parent=0 // pred_check_branch
    %319 = sbr.rel (0) target = $region37
  $region36: #{mlp_forward.1} parent=0 // pred_region
    _
  $region37: #{mlp_forward.1} parent=0 // pred_fallthru
    _

</llo_original>
